<compile_context>
chip_gen: v6e
topology: v6e:2x2x1
jax: 0.10.0
libtpu: 0.0.40
codegen_flags: <defaults>
</compile_context>

<pallas_src>
import jax
import jax.numpy as jnp
from jax.experimental import pallas as pl
from jax.experimental.pallas import tpu as pltpu

_LANES = 128
_VMEM_LIMIT_BYTES = 40 * 1024 * 1024      # explicit scoped-VMEM limit, safe v5e..v7x
_SINGLE_BLOCK_BYTES = 8 * 1024 * 1024     # per-array block for the 1-pathway kernel
_MIN_PALLAS_ELEMS = 1024                  # below this a fused XLA max beats a launch


def _sublane_multiple(dtype) -> int:
    # f32 -> 8, bf16 -> 16, int8/fp8 -> 32 (packed-dtype sublane tiling).
    return max(8, 32 // jnp.dtype(dtype).itemsize)


def _vmem_capacity_bytes() -> int:
    try:
        cap = getattr(pltpu.get_tpu_info(), "vmem_capacity_bytes", None)
        if cap:
            return int(cap)
    except Exception:
        pass
    return 128 * 1024 * 1024              # v5e/v6e default if the query fails


def _fused_block_bytes() -> int:
    # v7x (64 MiB VMEM/TC, 3.2 TB/s HBM): 4 MiB/array blocks halve the relative
    # per-step overhead; 4 arrays x 2 buffers x 4 MiB = 32 MiB fits with room.
    # v5e/v6e (128 MiB VMEM, <=1.4 TB/s HBM): 2 MiB/array is already <5% overhead.
    return 4 * 1024 * 1024 if _vmem_capacity_bytes() <= 64 * 1024 * 1024 else 2 * 1024 * 1024


def _target_rows(block_bytes: int, dtype) -> int:
    itemsize = jnp.dtype(dtype).itemsize
    mult = _sublane_multiple(dtype)
    return max(mult, (block_bytes // (_LANES * itemsize)) // mult * mult)


def _tile_for_blocks(rows: int, n_blocks: int, mult: int):
    """Row-tile giving EXACTLY n_blocks grid blocks over `rows` (sublane-legal),
    preferring an exact divisor (no masked ragged last block). None if impossible."""
    if n_blocks == 1:
        return rows                        # single full-extent block: always legal
    if rows < n_blocks:
        return None
    lo = pl.cdiv(rows, n_blocks)           # smallest tile with <= n_blocks blocks
    hi = (rows - 1) // (n_blocks - 1)      # largest tile with >= n_blocks blocks
    if rows % n_blocks == 0 and (rows // n_blocks) % mult == 0:
        return rows // n_blocks            # exact split, no ragged last block
    t = ((lo + mult - 1) // mult) * mult   # sublane-aligned tile, ragged last block
    return t if t <= hi else None


def _grid_candidates(n0: int):
    # Prefer an even block count >= 2 (balances v7x's two TensorCores when the
    # grid axis is "parallel"); fall back to the minimal count.
    if n0 % 2:
        yield n0 + 1
    yield n0


def _relu_kernel(x_ref, o_ref):
    o_ref[...] = jnp.maximum(x_ref[...], 0)


def _mc_relu_kernel(xc_ref, xb_ref, oc_ref, ob_ref):
    # Pure elementwise ReLU on both pathway tiles (VPU); HBM-bandwidth bound.
    oc_ref[...] = jnp.maximum(xc_ref[...], 0)
    ob_ref[...] = jnp.maximum(xb_ref[...], 0)


def _lane_aligned(x) -> bool:
    return x.size > 0 and x.size % _LANES == 0


def pallas_relu(x: jax.Array, *, inplace: bool = False) -> jax.Array:
    """Single-pathway ReLU (MCReLU.forward_color / forward_brightness)."""
    if x.size < _MIN_PALLAS_ELEMS or not _lane_aligned(x):
        # Tiny or non-lane-aligned: a fused XLA elementwise max is strictly
        # cheaper (no launch overhead, no pad/slice HBM round trips).
        return jnp.maximum(x, 0)
    x2 = x.reshape(-1, _LANES)             # metadata-only reshape
    rows = x2.shape[0]
    mult = _sublane_multiple(x2.dtype)
    target = _target_rows(_SINGLE_BLOCK_BYTES, x2.dtype)
    n0 = max(1, pl.cdiv(rows, target))
    nblk = tile = None
    for cand in _grid_candidates(n0):
        t = _tile_for_blocks(rows, cand, mult)
        if t is not None:
            nblk, tile = cand, t
            break
    if tile is None:                       # awkward row count: masked ragged last block
        tile = target
        nblk = pl.cdiv(rows, tile)
    y2 = pl.pallas_call(
        _relu_kernel,
        out_shape=jax.ShapeDtypeStruct(x2.shape, x2.dtype),
        grid=(nblk,),
        in_specs=[pl.BlockSpec((tile, _LANES), lambda i: (i, 0))],
        out_specs=pl.BlockSpec((tile, _LANES), lambda i: (i, 0)),
        compiler_params=pltpu.CompilerParams(
            dimension_semantics=("parallel",),
            vmem_limit_bytes=_VMEM_LIMIT_BYTES,
        ),
        input_output_aliases=({0: 0} if inplace else {}),
    )(x2)
    return y2.reshape(x.shape)


def _fused_relu_call(c2, b2, inplace):
    """One pallas_call covering both pathways with EQUAL block counts and plain
    identity index maps (injective outputs -> parallel-safe on v7x megacore).
    Returns None if no legal equalized tiling exists."""
    rows_c, rows_b = c2.shape[0], b2.shape[0]
    mult_c = _sublane_multiple(c2.dtype)
    mult_b = _sublane_multiple(b2.dtype)
    block_bytes = _fused_block_bytes()
    n0 = max(1,
             pl.cdiv(rows_c, _target_rows(block_bytes, c2.dtype)),
             pl.cdiv(rows_b, _target_rows(block_bytes, b2.dtype)))
    for n in _grid_candidates(n0):
        tile_c = _tile_for_blocks(rows_c, n, mult_c)
        tile_b = _tile_for_blocks(rows_b, n, mult_b)
        if tile_c is not None and tile_b is not None:
            break
    else:
        return None

    return pl.pallas_call(
        _mc_relu_kernel,
        out_shape=(jax.ShapeDtypeStruct(c2.shape, c2.dtype),
                   jax.ShapeDtypeStruct(b2.shape, b2.dtype)),
        grid=(n,),
        in_specs=[pl.BlockSpec((tile_c, _LANES), lambda i: (i, 0)),
                  pl.BlockSpec((tile_b, _LANES), lambda i: (i, 0))],
        out_specs=(pl.BlockSpec((tile_c, _LANES), lambda i: (i, 0)),
                   pl.BlockSpec((tile_b, _LANES), lambda i: (i, 0))),
        compiler_params=pltpu.CompilerParams(
            dimension_semantics=("parallel",),
            vmem_limit_bytes=_VMEM_LIMIT_BYTES,
        ),
        input_output_aliases=({0: 0, 1: 1} if inplace else {}),
    )(c2, b2)


def mc_relu(color_input: jax.Array, brightness_input: jax.Array, *, inplace: bool = False):
    """MCReLU.forward: ReLU on both pathways, fused into one Pallas call when
    both are lane-dense; otherwise each pathway takes its own best path."""
    if (_lane_aligned(color_input) and _lane_aligned(brightness_input)
            and (color_input.size + brightness_input.size) >= _MIN_PALLAS_ELEMS):
        c2 = color_input.reshape(-1, _LANES)        # metadata-only reshapes
        b2 = brightness_input.reshape(-1, _LANES)
        fused = _fused_relu_call(c2, b2, inplace)
        if fused is not None:
            c_out2, b_out2 = fused
            return (c_out2.reshape(color_input.shape),
                    b_out2.reshape(brightness_input.shape))
    # Mixed / awkward shapes: handle pathways independently (pallas_relu falls
    # back to a fused XLA max for tiny or non-lane-aligned tensors).
    return (pallas_relu(color_input, inplace=inplace),
            pallas_relu(brightness_input, inplace=inplace))


if __name__ == "__main__":
    root = jax.random.PRNGKey(0)
    k1, k2, k3, k4, k5, k6 = jax.random.split(root, 6)

    # Small shapes consistent with the module's docstring example.
    color_input = jax.random.normal(k1, (2, 3, 16, 16), dtype=jnp.float32)
    brightness_input = jax.random.normal(k2, (2, 1, 16, 16), dtype=jnp.float32)

    color_out, bright_out = mc_relu(color_input, brightness_input)
    jax.block_until_ready(color_out)
    jax.block_until_ready(bright_out)
    assert color_out.shape == color_input.shape and color_out.dtype == color_input.dtype
    assert bright_out.shape == brightness_input.shape and bright_out.dtype == brightness_input.dtype
    assert jnp.array_equal(color_out, jnp.maximum(color_input, 0.0))
    assert jnp.array_equal(bright_out, jnp.maximum(brightness_input, 0.0))

    # Multi-block fused grid: equalized block counts, identity index maps,
    # exact-divisor tiles (no ragged masked last block).
    c_big = jax.random.normal(k3, (4, 3, 256, 192), dtype=jnp.float32)   # 4608 rows of 128
    b_big = jax.random.normal(k4, (4, 1, 256, 192), dtype=jnp.float32)   # 1536 rows of 128
    c_big_out, b_big_out = mc_relu(c_big, b_big)
    jax.block_until_ready(c_big_out)
    jax.block_until_ready(b_big_out)
    assert jnp.array_equal(c_big_out, jnp.maximum(c_big, 0.0))
    assert jnp.array_equal(b_big_out, jnp.maximum(b_big, 0.0))

    # Mixed eligibility: lane-aligned color stays on the Pallas kernel while the
    # tiny misaligned brightness pathway takes the XLA fast path.
    c_mix = jax.random.normal(k5, (2, 4, 16, 16), dtype=jnp.float32)     # 2048 elems, aligned
    b_mix = jax.random.normal(k6, (2, 1, 5, 7), dtype=jnp.float32)       # 70 elems, misaligned
    c_mix_out, b_mix_out = mc_relu(c_mix, b_mix)
    jax.block_until_ready(c_mix_out)
    jax.block_until_ready(b_mix_out)
    assert jnp.array_equal(c_mix_out, jnp.maximum(c_mix, 0.0))
    assert jnp.array_equal(b_mix_out, jnp.maximum(b_mix, 0.0))

    # Single-pathway entry points (forward_color / forward_brightness).
    c_single = pallas_relu(c_big)
    jax.block_until_ready(c_single)
    assert jnp.array_equal(c_single, jnp.maximum(c_big, 0.0))

    print("KERNEL_OK")
</pallas_src>

<mosaic_0001>
module attributes {stable_mosaic.version = 11 : i64} {
  func.func @_mc_relu_kernel(%arg0: i32, %arg1: memref<12x128xf32, #tpu.memory_space<vmem>>, %arg2: memref<4x128xf32, #tpu.memory_space<vmem>>, %arg3: memref<12x128xf32, #tpu.memory_space<vmem>>, %arg4: memref<4x128xf32, #tpu.memory_space<vmem>>) attributes {dimension_semantics = [#tpu.dimension_semantics<parallel>], iteration_bounds = array<i64: 1>, scalar_prefetch = 0 : i64, scratch_operands = 0 : i64, tpu.core_type = #tpu.core_type<tc>, window_params = [{transform_indices = @transform_0, window_bounds = array<i64: 12, 128>}, {transform_indices = @transform_1, window_bounds = array<i64: 4, 128>}, {transform_indices = @transform_2, window_bounds = array<i64: 12, 128>}, {transform_indices = @transform_3, window_bounds = array<i64: 4, 128>}]} {
    %c0 = arith.constant 0 : index
    %c0_0 = arith.constant 0 : index
    %0 = vector.load %arg1[%c0, %c0_0] : memref<12x128xf32, #tpu.memory_space<vmem>>, vector<12x128xf32>
    %cst = arith.constant 0.000000e+00 : f32
    %1 = vector.broadcast %cst : f32 to vector<12x128xf32>
    %2 = arith.maximumf %0, %1 : vector<12x128xf32>
    %c0_1 = arith.constant 0 : index
    %c0_2 = arith.constant 0 : index
    %3 = vector.load %arg3[%c0_1, %c0_2] : memref<12x128xf32, #tpu.memory_space<vmem>>, vector<12x128xf32>
    tpu.vector_store %arg3[%c0_1, %c0_2], %2 {strides = array<i32>} : memref<12x128xf32, #tpu.memory_space<vmem>>, vector<12x128xf32>,
    %c0_3 = arith.constant 0 : index
    %c0_4 = arith.constant 0 : index
    %4 = vector.load %arg2[%c0_3, %c0_4] : memref<4x128xf32, #tpu.memory_space<vmem>>, vector<4x128xf32>
    %cst_5 = arith.constant 0.000000e+00 : f32
    %5 = vector.broadcast %cst_5 : f32 to vector<4x128xf32>
    %6 = arith.maximumf %4, %5 : vector<4x128xf32>
    %c0_6 = arith.constant 0 : index
    %c0_7 = arith.constant 0 : index
    %7 = vector.load %arg4[%c0_6, %c0_7] : memref<4x128xf32, #tpu.memory_space<vmem>>, vector<4x128xf32>
    tpu.vector_store %arg4[%c0_6, %c0_7], %6 {strides = array<i32>} : memref<4x128xf32, #tpu.memory_space<vmem>>, vector<4x128xf32>,
    return
  }
  func.func @transform_0(%arg0: i32) -> (i32, i32) {
    %c0_i32 = arith.constant 0 : i32
    %c0_i32_0 = arith.constant 0 : i32
    return %arg0, %c0_i32 : i32, i32
  }
  func.func @transform_1(%arg0: i32) -> (i32, i32) {
    %c0_i32 = arith.constant 0 : i32
    %c0_i32_0 = arith.constant 0 : i32
    return %arg0, %c0_i32 : i32, i32
  }
  func.func @transform_2(%arg0: i32) -> (i32, i32) {
    %c0_i32 = arith.constant 0 : i32
    %c0_i32_0 = arith.constant 0 : i32
    return %arg0, %c0_i32 : i32, i32
  }
  func.func @transform_3(%arg0: i32) -> (i32, i32) {
    %c0_i32 = arith.constant 0 : i32
    %c0_i32_0 = arith.constant 0 : i32
    return %arg0, %c0_i32 : i32, i32
  }
}

</mosaic_0001>

<llo_original>
// kernel: tpu_custom_call.1
$region0: #{tpu_custom_call.1}
  #allocation0 [shape = 'u32[]', space=smem, size = 0x4, offset = 0x4, fixed_abs, tag = 'smem constant byte address 0x4 - core index']
  #allocation1 [shape = 'u32[144,128]{1,0:T(1,128)}', space=vmem, size = 0x12000, scoped, tag = 'internal scratch']
  %s0 = inlined_call_operand.hbm [shape: f32[12,128], index: 0, kind: input, shape index: {}]
  %s1 = inlined_call_operand.hbm [shape: f32[4,128], index: 1, kind: input, shape index: {}]
  %s2 = inlined_call_operand.hbm [shape: f32[12,128], index: 2, kind: output, shape index: {0}]
  %s3 = inlined_call_operand.hbm [shape: f32[4,128], index: 3, kind: output, shape index: {1}]
  %4 = xla_tuple %s2, %s3
  %s5 = sld [smem:[#allocation0]]
  $region34: #{tpu_custom_call.1} parent=0
    _
  %s7 = ssub.s32 1, %s5
  %s8 = scalar_select 0, %s7, %s5
  $region1: #{tpu_custom_call.1} parent=0
    #allocation2 [shape = 'u8[8192]{0}', space=vmem, size = 0x2000, scoped, tag = 'input window, operand 0, single buffered']
    #allocation3 [shape = 's32[1]{0}', space=sflag, size = 0x4, scoped, tag = 'scoped memory for tpu_custom_call.1']
    #allocation4 [shape = 's32[1]{0}', space=sflag, size = 0x4, scoped, tag = 'scoped memory for tpu_custom_call.1']
    #allocation5 [shape = 'u8[2048]{0}', space=vmem, size = 0x800, scoped, tag = 'input window, operand 1, single buffered']
    #allocation6 [shape = 's32[1]{0}', space=sflag, size = 0x4, scoped, tag = 'scoped memory for tpu_custom_call.1']
    #allocation7 [shape = 'u8[8192]{0}', space=vmem, size = 0x2000, scoped, tag = 'output window, operand 0, single buffered']
    #allocation8 [shape = 'u8[2048]{0}', space=vmem, size = 0x800, scoped, tag = 'output window, operand 1, single buffered']
    #allocation9 [shape = 's32[1]{0}', space=sflag, size = 0x4, scoped, tag = 'scoped memory for tpu_custom_call.1']
    %9 = vsyncpa [#allocation3], 0
    %10 = vsyncpa [#allocation6], 0
    %11 = vsyncpa [#allocation4], 0
    %12 = vsyncpa [#allocation9], 0
    // Predicated region
    $region2: #{tpu_custom_call.1} parent=1 // pred_check
      _
    $region3: #{tpu_custom_call.1} parent=1 // pred_check_branch
      %14 = sbr.rel (0) target = $region5
    $region4: #{tpu_custom_call.1} parent=1 // pred_region
      %s16 = ssub.s32 256, 256
      %17 = vsyncadd [#allocation3], %s16
      %s18 = sshll.u32 [#allocation2], 4
      %s19 = int_to_ptr.vmem [resolvable:$true] %s18
      %24 = dma.hbm_to_vmem [thread:$0]  %s0, 256, %s19, [#allocation3], 128, 128, 8
    $region5: #{tpu_custom_call.1} parent=1 // pred_fallthru
      _
    // Predicated region
    $region6: #{tpu_custom_call.1} parent=1 // pred_check
      _
    $region7: #{tpu_custom_call.1} parent=1 // pred_check_branch
      %26 = sbr.rel (0) target = $region9
    $region8: #{tpu_custom_call.1} parent=1 // pred_region
      %s28 = ssub.s32 64, 64
      %29 = vsyncadd [#allocation6], %s28
      %s31 = sshll.u32 [#allocation5], 4
      %s32 = int_to_ptr.vmem [resolvable:$true] %s31
      %34 = dma.hbm_to_vmem [thread:$0]  %s1, 64, %s32, [#allocation6]
    $region9: #{tpu_custom_call.1} parent=1 // pred_fallthru
      _
    // Predicated region
    $region10: #{tpu_custom_call.1} parent=1 // pred_check
      _
    $region11: #{tpu_custom_call.1} parent=1 // pred_check_branch
      %36 = sbr.rel (0) target = $region13
    $region12: #{tpu_custom_call.1} parent=1 // pred_region
      %37 = dma.done [#allocation3], 256
    $region13: #{tpu_custom_call.1} parent=1 // pred_fallthru
      _
    // Predicated region
    $region14: #{tpu_custom_call.1} parent=1 // pred_check
      _
    $region15: #{tpu_custom_call.1} parent=1 // pred_check_branch
      %39 = sbr.rel (0) target = $region17
    $region16: #{tpu_custom_call.1} parent=1 // pred_region
      %40 = dma.done [#allocation6], 64
    $region17: #{tpu_custom_call.1} parent=1 // pred_fallthru
      _
    %v41 = vld [vmem:[#allocation2] sm:$0xff]
    %v42 = vld [vmem:[#allocation2 + $0x8] sm:$0xf]
    %v43 = vmax.f32 %v41, 0.0
    %v44 = vmax.f32 %v42, 0.0
    %45 = vst [vmem:[#allocation7] sm:$0xff] %v43
    %46 = vst [vmem:[#allocation7 + $0x8] sm:$0xf] %v44
    %v47 = vld [vmem:[#allocation5] sm:$0xf]
    %v48 = vmax.f32 %v47, 0.0
    %49 = vst [vmem:[#allocation8] sm:$0xf] %v48
    // Predicated region
    $region18: #{tpu_custom_call.1} parent=1 // pred_check
      _
    $region19: #{tpu_custom_call.1} parent=1 // pred_check_branch
      %51 = sbr.rel (0) target = $region21
    $region20: #{tpu_custom_call.1} parent=1 // pred_region
      %s53 = ssub.s32 256, 256
      %54 = vsyncadd [#allocation4], %s53
      %s55 = sshll.u32 [#allocation7], 4
      %s56 = int_to_ptr.vmem [resolvable:$true] %s55
      %61 = dma.vmem_to_hbm [thread:$0]  %s56, 256, %s2, [#allocation4], 128, 128, 8
    $region21: #{tpu_custom_call.1} parent=1 // pred_fallthru
      _
    // Predicated region
    $region22: #{tpu_custom_call.1} parent=1 // pred_check
      _
    $region23: #{tpu_custom_call.1} parent=1 // pred_check_branch
      %63 = sbr.rel (0) target = $region25
    $region24: #{tpu_custom_call.1} parent=1 // pred_region
      %s65 = ssub.s32 64, 64
      %66 = vsyncadd [#allocation9], %s65
      %s68 = sshll.u32 [#allocation8], 4
      %s69 = int_to_ptr.vmem [resolvable:$true] %s68
      %71 = dma.vmem_to_hbm [thread:$0]  %s69, 64, %s3, [#allocation9]
    $region25: #{tpu_custom_call.1} parent=1 // pred_fallthru
      _
    // Predicated region
    $region26: #{tpu_custom_call.1} parent=1 // pred_check
      _
    $region27: #{tpu_custom_call.1} parent=1 // pred_check_branch
      %73 = sbr.rel (0) target = $region29
    $region28: #{tpu_custom_call.1} parent=1 // pred_region
      %74 = dma.done [#allocation4], 256
    $region29: #{tpu_custom_call.1} parent=1 // pred_fallthru
      _
    // Predicated region
    $region30: #{tpu_custom_call.1} parent=1 // pred_check
      _
    $region31: #{tpu_custom_call.1} parent=1 // pred_check_branch
      %76 = sbr.rel (0) target = $region33
    $region32: #{tpu_custom_call.1} parent=1 // pred_region
      %77 = dma.done [#allocation9], 64
    $region33: #{tpu_custom_call.1} parent=1 // pred_fallthru
      _
    %78 = vsyncpa [#allocation3], 1
    %79 = vsyncpa [#allocation6], 1
    %80 = vsyncpa [#allocation4], 1
    %81 = vsyncpa [#allocation9], 1

</llo_original>
